<compile_context>
chip_gen: v7x
topology: tpu7x:2x2x1
jax: 0.10.0
libtpu: 0.0.40
codegen_flags: <defaults>
</compile_context>

<pallas_src>
import jax
import jax.numpy as jnp
from jax.experimental import pallas as pl
from jax.experimental.pallas import tpu as pltpu


# --------------------------------------------------------------------------- kernels
def _mm_kernel_channel_lanes(x_ref, w_ref, o_ref):
    """x: (tM, B, 2Ci), w: (tM, 2Ci, 2Co) -> o: (tM, B, 2Co)  [lanes = 2Co]."""
    o_ref[...] = jax.lax.dot_general(
        x_ref[...], w_ref[...],
        dimension_numbers=(((2,), (1,)), ((0,), (0,))),
        preferred_element_type=jnp.float32,
    )


def _mm_kernel_batch_lanes(x_ref, w_ref, o_ref):
    """x: (tM, 2Ci, B), w: (tM, 2Ci, 2Co) -> o: (tM, 2Co, B)  [lanes = B]."""
    o_ref[...] = jax.lax.dot_general(
        w_ref[...], x_ref[...],
        dimension_numbers=(((1,), (1,)), ((0,), (0,))),
        preferred_element_type=jnp.float32,
    )


# --------------------------------------------------------------------------- sizing
def _round_up(x, m):
    return ((x + m - 1) // m) * m


def _slab_bytes(rows, cols, itemsize):
    """Bytes of one (rows, cols) block after (8*packing, 128) VMEM tiling."""
    sublane = 8 * max(1, 4 // itemsize)
    return itemsize * _round_up(rows, sublane) * _round_up(cols, 128)


def _vmem_budget_and_limit():
    """(double-buffer budget, scoped vmem_limit_bytes), generation-aware."""
    try:
        cap = int(pltpu.get_tpu_info().vmem_capacity_bytes)
    except Exception:  # pragma: no cover - conservative fallback
        cap = 64 * 1024 * 1024
    if cap <= 64 * 1024 * 1024:           # v7x: 64 MiB physical per TensorCore
        return 24 * 1024 * 1024, 48 * 1024 * 1024
    return 48 * 1024 * 1024, 96 * 1024 * 1024   # v5e / v6e: 128 MiB physical


def _pick_tile_m(M, per_mode_bytes, vmem_budget_bytes, min_steps=4, step_multiple=2):
    """Mode-tile size: largest double-buffered tile under budget, capped so the grid
    has >= min_steps balanced steps (restores DMA/compute pipelining), an even step
    count (v7x's 2 TensorCores), preferring an exact divisor of M (no padded tail)."""
    t_max = max(1, vmem_budget_bytes // (2 * per_mode_bytes))   # x2: double buffering
    need = max(min_steps, -(-M // t_max))
    need = -(-need // step_multiple) * step_multiple
    need = max(1, min(need, M))
    limit = min(M, max(need * 4, need + 16))
    for steps in range(need, limit + 1):                        # even divisor of M
        if M % steps == 0 and steps % step_multiple == 0:
            return M // steps
    for steps in range(need, limit + 1):                        # any divisor of M
        if M % steps == 0:
            return M // steps
    return max(1, -(-M // need))                                # uneven tail (masked)


# --------------------------------------------------------------------------- pallas call
def _compl_mul_pallas(x_stack, w_stack, *, batch_lanes):
    """Stacked real channel contraction over retained Fourier modes.

    channel-lane layout: x (M, B, 2Ci) @ w (M, 2Ci, 2Co) -> (M, B, 2Co) f32
    batch-lane  layout: w (M, 2Ci, 2Co)^T-contract x (M, 2Ci, B) -> (M, 2Co, B) f32
    """
    M = x_stack.shape[0]
    if batch_lanes:
        out_tail = (w_stack.shape[2], x_stack.shape[2])   # (2Co, B)
        kernel = _mm_kernel_batch_lanes
    else:
        out_tail = (x_stack.shape[1], w_stack.shape[2])   # (B, 2Co)
        kernel = _mm_kernel_channel_lanes

    x_isz = jnp.dtype(x_stack.dtype).itemsize
    w_isz = jnp.dtype(w_stack.dtype).itemsize
    per_mode_bytes = (
        _slab_bytes(x_stack.shape[1], x_stack.shape[2], x_isz)
        + _slab_bytes(w_stack.shape[1], w_stack.shape[2], w_isz)
        + _slab_bytes(out_tail[0], out_tail[1], 4)
    )
    vmem_budget, vmem_limit = _vmem_budget_and_limit()
    tile_m = _pick_tile_m(M, per_mode_bytes, vmem_budget)
    grid = (pl.cdiv(M, tile_m),)

    return pl.pallas_call(
        kernel,
        out_shape=jax.ShapeDtypeStruct((M,) + out_tail, jnp.float32),
        grid_spec=pltpu.PrefetchScalarGridSpec(
            num_scalar_prefetch=0,
            grid=grid,
            in_specs=[
                pl.BlockSpec((tile_m,) + tuple(x_stack.shape[1:]), lambda m: (m, 0, 0)),
                # TODO(synk): if a profile shows exposed DMA on the weight stream,
                # sweep pipeline_mode=pl.Buffered(3) on this spec (cheap now in bf16).
                pl.BlockSpec((tile_m,) + tuple(w_stack.shape[1:]), lambda m: (m, 0, 0)),
            ],
            out_specs=pl.BlockSpec((tile_m,) + out_tail, lambda m: (m, 0, 0)),
        ),
        compiler_params=pltpu.CompilerParams(
            dimension_semantics=("parallel",),   # independent modes -> v7x 2-TC split
            vmem_limit_bytes=vmem_limit,
        ),
    )(x_stack, w_stack)


# --------------------------------------------------------------------------- wrapper
def prepare_spectral_weights(weights1, weights2, dtype=jnp.bfloat16):
    """Once-per-layer restack: complex (Ci,Co,m1,m2) x2 -> real (M, 2Ci, 2Co) in `dtype`.

        w_stack[m] = [[ wr  wi ]
                      [-wi  wr ]]     so  [xr|xi] @ w_stack = [real|imag].
    """
    w = jnp.concatenate([weights1, weights2], axis=2)            # (Ci, Co, 2*m1, m2)
    Ci, Co, m1x2, m2 = w.shape
    M = m1x2 * m2
    wr = jnp.real(w).astype(jnp.float32)
    wi = jnp.imag(w).astype(jnp.float32)
    top = jnp.concatenate([wr, wi], axis=1)                      # (Ci, 2Co, 2m1, m2)
    bot = jnp.concatenate([-wi, wr], axis=1)                     # (Ci, 2Co, 2m1, m2)
    wk = jnp.concatenate([top, bot], axis=0)                     # (2Ci, 2Co, 2m1, m2)
    wk = jnp.transpose(wk, (2, 3, 0, 1)).reshape(M, 2 * Ci, 2 * Co)
    return wk.astype(dtype)


def spectral_conv2d_fast(x, weights1, weights2, modes1, modes2, *,
                         w_stack=None, compute_dtype=jnp.bfloat16, batch_lanes=None):
    """Forward pass of SpectralConv2d_fast.

    x:        (B, Ci, H, W) float32  (NCHW, matching the PyTorch module)
    weights1: (Ci, Co, modes1, modes2) complex64
    weights2: (Ci, Co, modes1, modes2) complex64
    w_stack:  optional precomputed prepare_spectral_weights(...) (hoist per layer)
    returns:  (B, Co, H, W) float32
    """
    B, Ci, H, W = x.shape
    Co = weights1.shape[1]
    Wf = W // 2 + 1
    m1, m2 = modes1, modes2
    assert m1 <= H // 2 and m2 <= Wf, "retained modes exceed the spectrum"

    if w_stack is None:
        # In a real model this is hoisted out and done once per layer.
        w_stack = prepare_spectral_weights(weights1, weights2, dtype=compute_dtype)
    compute_dtype = w_stack.dtype                                 # keep x/w dtypes matched
    M = 2 * m1 * m2

    if batch_lanes is None:
        # Lane-dense output stores: prefer 2Co on lanes; flip to batch lanes only when
        # B is wide and 2Co is narrow.  Never zero-pad Co (doubles the weight stream).
        batch_lanes = (B >= 128) and (2 * Co < 128)

    # --- FFT + corner gather (XLA glue; no Pallas FFT primitive) ------------
    # TODO(synk): rfft2/irfft2 have no Pallas equivalent and stay in jnp.fft.
    x_ft = jnp.fft.rfft2(x)                                       # (B, Ci, H, Wf) c64
    x_sel = jnp.concatenate(
        [x_ft[:, :, :m1, :m2], x_ft[:, :, H - m1:, :m2]], axis=2)  # (B, Ci, 2m1, m2)
    # Real/imag split BEFORE the big transpose: transposes run on narrow real data.
    x_ri = jnp.concatenate(
        [jnp.real(x_sel), jnp.imag(x_sel)], axis=1).astype(compute_dtype)  # (B, 2Ci, 2m1, m2)

    if batch_lanes:
        x_stack = jnp.transpose(x_ri, (2, 3, 1, 0)).reshape(M, 2 * Ci, B)
    else:
        x_stack = jnp.transpose(x_ri, (2, 3, 0, 1)).reshape(M, B, 2 * Ci)

    # --- Hot path: stacked complex channel contraction in Pallas ------------
    out = _compl_mul_pallas(x_stack, w_stack, batch_lanes=batch_lanes)   # f32

    if batch_lanes:
        out_t = jnp.transpose(out.reshape(2 * m1, m2, 2 * Co, B), (3, 2, 0, 1))
    else:
        out_t = jnp.transpose(out.reshape(2 * m1, m2, B, 2 * Co), (2, 3, 0, 1))
    out_c = (out_t[:, :Co] + 1j * out_t[:, Co:]).astype(jnp.complex64)   # (B, Co, 2m1, m2)

    # Assemble out_ft by concatenation with zero blocks (no full-tensor scatters).
    zc = jnp.zeros((B, Co, m1, Wf - m2), jnp.complex64)
    top = jnp.concatenate([out_c[:, :, :m1], zc], axis=3)        # (B, Co, m1, Wf)
    bot = jnp.concatenate([out_c[:, :, m1:], zc], axis=3)        # (B, Co, m1, Wf)
    mid = jnp.zeros((B, Co, H - 2 * m1, Wf), jnp.complex64)
    out_ft = jnp.concatenate([top, mid, bot], axis=2)            # (B, Co, H, Wf)

    # --- inverse FFT (glue) --------------------------------------------------
    y = jnp.fft.irfft2(out_ft, s=(H, W))                         # (B, Co, H, W)
    return y.astype(jnp.float32)


# --------------------------------------------------------------------------- reference
def _reference(x, weights1, weights2, modes1, modes2):
    """Pure-JAX reference mirroring the PyTorch forward, for correctness check."""
    B, Ci, H, W = x.shape
    Co = weights1.shape[1]
    x_ft = jnp.fft.rfft2(x)
    out_ft = jnp.zeros((B, Co, H, W // 2 + 1), dtype=jnp.complex64)
    out_ft = out_ft.at[:, :, :modes1, :modes2].set(
        jnp.einsum('bixy,ioxy->boxy', x_ft[:, :, :modes1, :modes2], weights1))
    out_ft = out_ft.at[:, :, H - modes1:, :modes2].set(
        jnp.einsum('bixy,ioxy->boxy', x_ft[:, :, H - modes1:, :modes2], weights2))
    return jnp.fft.irfft2(out_ft, s=(H, W))


if __name__ == "__main__":
    # Small shapes consistent with the module.
    B, Ci, Co = 2, 4, 4
    H, W = 16, 16
    modes1, modes2 = 4, 4

    key = jax.random.PRNGKey(0)
    kx, k1r, k1i, k2r, k2i = jax.random.split(key, 5)

    x = jax.random.normal(kx, (B, Ci, H, W), dtype=jnp.float32)

    # Deterministic param init mimicking torch.rand(..., dtype=cfloat) * scale.
    scale = 1.0 / (Ci * Co)
    weights1 = (scale * (jax.random.uniform(k1r, (Ci, Co, modes1, modes2))
                         + 1j * jax.random.uniform(k1i, (Ci, Co, modes1, modes2)))
                ).astype(jnp.complex64)
    weights2 = (scale * (jax.random.uniform(k2r, (Ci, Co, modes1, modes2))
                         + 1j * jax.random.uniform(k2i, (Ci, Co, modes1, modes2)))
                ).astype(jnp.complex64)

    y_ref = jax.block_until_ready(_reference(x, weights1, weights2, modes1, modes2))

    # (a) f32 path, tight tolerance — validates stacking / indexing exactly.
    w_f32 = jax.block_until_ready(
        prepare_spectral_weights(weights1, weights2, dtype=jnp.float32))
    y_f32 = jax.block_until_ready(spectral_conv2d_fast(
        x, weights1, weights2, modes1, modes2, w_stack=w_f32))
    assert y_f32.shape == (B, Co, H, W), y_f32.shape
    assert jnp.allclose(y_f32, y_ref, atol=1e-4, rtol=1e-4), \
        float(jnp.max(jnp.abs(y_f32 - y_ref)))

    # (b) default bf16 path (halved HBM/VMEM traffic), loose tolerance.
    w_bf16 = jax.block_until_ready(prepare_spectral_weights(weights1, weights2))
    y_bf16 = jax.block_until_ready(spectral_conv2d_fast(
        x, weights1, weights2, modes1, modes2, w_stack=w_bf16))
    rel = float(jnp.linalg.norm(y_bf16 - y_ref) / jnp.linalg.norm(y_ref))
    assert y_bf16.shape == (B, Co, H, W), y_bf16.shape
    assert rel < 2e-2, rel

    # (c) batch-lane layout path (auto-selected when B >= 128 and 2*Co < 128);
    #     forced here at small shape purely to validate correctness of that path.
    y_bl = jax.block_until_ready(spectral_conv2d_fast(
        x, weights1, weights2, modes1, modes2, w_stack=w_bf16, batch_lanes=True))
    rel_bl = float(jnp.linalg.norm(y_bl - y_ref) / jnp.linalg.norm(y_ref))
    assert rel_bl < 2e-2, rel_bl

    print("KERNEL_OK")
</pallas_src>

<mosaic_0001>
module attributes {stable_mosaic.version = 11 : i64} {
  func.func @_mm_kernel_channel_lanes(%arg0: i32, %arg1: memref<8x2x8xf32, #tpu.memory_space<vmem>>, %arg2: memref<8x8x8xf32, #tpu.memory_space<vmem>>, %arg3: memref<8x2x8xf32, #tpu.memory_space<vmem>>) attributes {dimension_semantics = [#tpu.dimension_semantics<parallel>], iteration_bounds = array<i64: 4>, scalar_prefetch = 0 : i64, scratch_operands = 0 : i64, tpu.core_type = #tpu.core_type<tc>, window_params = [{transform_indices = @transform_0, window_bounds = array<i64: 8, 2, 8>}, {transform_indices = @transform_1, window_bounds = array<i64: 8, 8, 8>}, {transform_indices = @transform_2, window_bounds = array<i64: 8, 2, 8>}]} {
    %c0 = arith.constant 0 : index
    %c0_0 = arith.constant 0 : index
    %c0_1 = arith.constant 0 : index
    %0 = vector.load %arg1[%c0, %c0_0, %c0_1] : memref<8x2x8xf32, #tpu.memory_space<vmem>>, vector<8x2x8xf32>
    %c0_2 = arith.constant 0 : index
    %c0_3 = arith.constant 0 : index
    %c0_4 = arith.constant 0 : index
    %1 = vector.load %arg2[%c0_2, %c0_3, %c0_4] : memref<8x8x8xf32, #tpu.memory_space<vmem>>, vector<8x8x8xf32>
    %cst = arith.constant dense<0.000000e+00> : vector<8x2x8xf32>
    %2 = tpu.matmul %0, %1, %cst {dimension_numbers = #tpu.dot_dimension_numbers<[2], [1], [1], [2], [0, 0, 0, 1, 1, 2], [0], [0]>} : vector<8x2x8xf32>, vector<8x8x8xf32>, vector<8x2x8xf32> -> vector<8x2x8xf32>
    %c0_5 = arith.constant 0 : index
    %c0_6 = arith.constant 0 : index
    %c0_7 = arith.constant 0 : index
    %3 = vector.load %arg3[%c0_5, %c0_6, %c0_7] : memref<8x2x8xf32, #tpu.memory_space<vmem>>, vector<8x2x8xf32>
    tpu.vector_store %arg3[%c0_5, %c0_6, %c0_7], %2 {strides = array<i32>} : memref<8x2x8xf32, #tpu.memory_space<vmem>>, vector<8x2x8xf32>,
    return
  }
  func.func @transform_0(%arg0: i32) -> (i32, i32, i32) {
    %c0_i32 = arith.constant 0 : i32
    %c0_i32_0 = arith.constant 0 : i32
    %c0_i32_1 = arith.constant 0 : i32
    return %arg0, %c0_i32, %c0_i32_0 : i32, i32, i32
  }
  func.func @transform_1(%arg0: i32) -> (i32, i32, i32) {
    %c0_i32 = arith.constant 0 : i32
    %c0_i32_0 = arith.constant 0 : i32
    %c0_i32_1 = arith.constant 0 : i32
    return %arg0, %c0_i32, %c0_i32_0 : i32, i32, i32
  }
  func.func @transform_2(%arg0: i32) -> (i32, i32, i32) {
    %c0_i32 = arith.constant 0 : i32
    %c0_i32_0 = arith.constant 0 : i32
    %c0_i32_1 = arith.constant 0 : i32
    return %arg0, %c0_i32, %c0_i32_0 : i32, i32, i32
  }
}

</mosaic_0001>

<llo_original>
// kernel: tpu_custom_call.1
$region0: #{tpu_custom_call.1}
  #allocation0 [shape = 'u32[]', space=smem, size = 0x4, offset = 0x4, fixed_abs, tag = 'smem constant byte address 0x4 - core index']
  #allocation1 [shape = 'u32[144,128]{1,0:T(1,128)}', space=vmem, size = 0x12000, scoped, tag = 'internal scratch']
  %s0 = inlined_call_operand.vmem [shape: f32[32,2,8], index: 0, kind: input, shape index: {}]
  %s1 = inlined_call_operand.vmem [shape: f32[32,8,8], index: 1, kind: input, shape index: {}]
  %s2 = inlined_call_operand.vmem [shape: f32[32,2,8], index: 2, kind: output, shape index: {}]
  %s3 = sld [smem:[#allocation0]]
  $region41: #{tpu_custom_call.1} parent=0
    _
  %s5 = ssub.s32 1, %s3
  %s6 = scalar_select 0, %s5, %s3
  loop: start=0, step=1, limit=6
  $region2: #{tpu_custom_call.1} parent=0 // loop_pre_header
    _
  $region3: #{tpu_custom_call.1} parent=0 // loop_header
    %s8 = sphi 0, %s12
    %p9 = scmp.ge.s32.totalorder %s8, 6
    %s18 = sphi 0, %s20
    %s21 = sphi 0, %s18
    %s22 = sphi 0, %s21
    %s38 = sphi 0, %s22
    %s44 = sphi 0, %s46
    %s47 = sphi 0, %s44
    %s48 = sphi 0, %s47
    %s64 = sphi 0, %s48
    %s70 = sphi 0, %s72
    %s73 = sphi 0, %s70
    %s74 = sphi 0, %s73
    %s90 = sphi 0, %s74
  $region4: #{tpu_custom_call.1} parent=0 // loop_header_branch
    %11 = sbr.rel (%p9) target = $region8
  $region5: #{tpu_custom_call.1} parent=0 // loop_body
    %s13 = ssub.s32 %s8, 1
    %s14 = ssub.s32 %s8, 2
    %s15 = sadd.s32 %s8, 1
    %s16 = ssub.s32 %s8, %s15
    %p17 = scmp.eq.s32.totalorder %s16, 0
    %s19 = sadd.s32 %s18, 1
    %s20 = scalar_select %p17, %s18, %s19
    %p23 = pneg %p17
    %p24 = scmp.eq.s32.totalorder %s8, 3
    %p25 = por %p23, %p24
    %p26 = scmp.ne.s32.totalorder %s18, %s21
    %p27 = scmp.eq.s32.totalorder %s8, 0
    %p28 = por %p26, %p27
    %p29 = scmp.ne.s32.totalorder %s18, %s21
    %p30 = scmp.eq.s32.totalorder %s13, 3
    %p31 = por %p29, %p30
    %p32 = scmp.ne.s32.totalorder %s21, %s22
    %p33 = scmp.eq.s32.totalorder %s13, 0
    %p34 = por %p32, %p33
    %p35 = scmp.ne.s32.totalorder %s21, %s22
    %p36 = scmp.eq.s32.totalorder %s14, 3
    %p37 = por %p35, %p36
    %p39 = scmp.ne.s32.totalorder %s22, %s38
    %p40 = scmp.eq.s32.totalorder %s14, 0
    %p41 = por %p39, %p40
    %s42 = ssub.s32 %s8, %s15
    %p43 = scmp.eq.s32.totalorder %s42, 0
    %s45 = sadd.s32 %s44, 1
    %s46 = scalar_select %p43, %s44, %s45
    %p49 = pneg %p43
    %p50 = scmp.eq.s32.totalorder %s8, 3
    %p51 = por %p49, %p50
    %p52 = scmp.ne.s32.totalorder %s44, %s47
    %p53 = scmp.eq.s32.totalorder %s8, 0
    %p54 = por %p52, %p53
    %p55 = scmp.ne.s32.totalorder %s44, %s47
    %p56 = scmp.eq.s32.totalorder %s13, 3
    %p57 = por %p55, %p56
    %p58 = scmp.ne.s32.totalorder %s47, %s48
    %p59 = scmp.eq.s32.totalorder %s13, 0
    %p60 = por %p58, %p59
    %p61 = scmp.ne.s32.totalorder %s47, %s48
    %p62 = scmp.eq.s32.totalorder %s14, 3
    %p63 = por %p61, %p62
    %p65 = scmp.ne.s32.totalorder %s48, %s64
    %p66 = scmp.eq.s32.totalorder %s14, 0
    %p67 = por %p65, %p66
    %s68 = ssub.s32 %s8, %s15
    %p69 = scmp.eq.s32.totalorder %s68, 0
    %s71 = sadd.s32 %s70, 1
    %s72 = scalar_select %p69, %s70, %s71
    %p75 = pneg %p69
    %p76 = scmp.eq.s32.totalorder %s8, 3
    %p77 = por %p75, %p76
    %p78 = scmp.ne.s32.totalorder %s70, %s73
    %p79 = scmp.eq.s32.totalorder %s8, 0
    %p80 = por %p78, %p79
    %p81 = scmp.ne.s32.totalorder %s70, %s73
    %p82 = scmp.eq.s32.totalorder %s13, 3
    %p83 = por %p81, %p82
    %p84 = scmp.ne.s32.totalorder %s73, %s74
    %p85 = scmp.eq.s32.totalorder %s13, 0
    %p86 = por %p84, %p85
    %p87 = scmp.ne.s32.totalorder %s73, %s74
    %p88 = scmp.eq.s32.totalorder %s14, 3
    %p89 = por %p87, %p88
    %p91 = scmp.ne.s32.totalorder %s74, %s90
    %p92 = scmp.eq.s32.totalorder %s14, 0
    %p93 = por %p91, %p92
    %p94 = scmp.le.s32.totalorder 1, %s8
    %p95 = scmp.lt.s32.totalorder %s8, 5
    %p96 = pnand %p94, %p95
    %p97 = pneg %p96
    // Predicated region
    $region9: #{tpu_custom_call.1} parent=5 // pred_check
      _
    $region10: #{tpu_custom_call.1} parent=5 // pred_check_branch
      %99 = sbr.rel (%p96) target = $region12
    $region11: #{tpu_custom_call.1} parent=5 // pred_region
      %s100 = ssub.s32 %s8, 1
    $region12: #{tpu_custom_call.1} parent=5 // pred_fallthru
      _
    %p101 = scmp.lt.s32.totalorder %s8, 4
    // Predicated region
    $region13: #{tpu_custom_call.1} parent=5 // pred_check
      %p102 = pneg %p101
    $region14: #{tpu_custom_call.1} parent=5 // pred_check_branch
      %104 = sbr.rel (%p102) target = $region16
    $region15: #{tpu_custom_call.1} parent=5 // pred_region
      // Predicated region
      $region17: #{tpu_custom_call.1} parent=15 // pred_check
        %p105 = pneg %p28
      $region18: #{tpu_custom_call.1} parent=15 // pred_check_branch
        %107 = sbr.rel (%p105) target = $region20
      $region19: #{tpu_custom_call.1} parent=15 // pred_region
        %s108 = smul.u32 8, %s8
        %p109 = scmp.lt.s32.totalorder %s108, 31
        %s110 = scalar_select %p109, %s108, 31
        %s111 = smul.addr %s110, 2
        %s112 = scalar_lea.vmem %s0, %s111
        %s113 = smul.u32 8, %s8
      $region20: #{tpu_custom_call.1} parent=15 // pred_fallthru
        _
      // Predicated region
      $region21: #{tpu_custom_call.1} parent=15 // pred_check
        %p114 = pneg %p54
      $region22: #{tpu_custom_call.1} parent=15 // pred_check_branch
        %116 = sbr.rel (%p114) target = $region24
      $region23: #{tpu_custom_call.1} parent=15 // pred_region
        %s117 = smul.u32 8, %s8
        %p118 = scmp.lt.s32.totalorder %s117, 31
        %s119 = scalar_select %p118, %s117, 31
        %s120 = smul.addr %s119, 8
        %s121 = scalar_lea.vmem %s1, %s120
        %s122 = smul.u32 8, %s8
      $region24: #{tpu_custom_call.1} parent=15 // pred_fallthru
        _
    $region16: #{tpu_custom_call.1} parent=5 // pred_fallthru
      _
    %p123 = scmp.le.s32.totalorder 1, %s8
    %p124 = scmp.lt.s32.totalorder %s8, 5
    %p125 = pnand %p123, %p124
    %p126 = pneg %p125
    // Predicated region
    $region25: #{tpu_custom_call.1} parent=5 // pred_check
      _
    $region26: #{tpu_custom_call.1} parent=5 // pred_check_branch
      %128 = sbr.rel (%p125) target = $region28
    $region27: #{tpu_custom_call.1} parent=5 // pred_region
      %s129 = ssub.s32 %s8, 1
      %s130 = smul.u32 8, %s13
      %p131 = scmp.lt.s32.totalorder %s130, 31
      %s132 = scalar_select %p131, %s130, 31
      %s133 = smul.addr %s132, 2
      %s134 = scalar_lea.vmem %s0, %s133
      %p135 = pneg %p34
      %p136 = pneg %p31
      %s137 = smul.u32 8, %s13
      %p138 = scmp.lt.s32.totalorder %s137, 31
      %s139 = scalar_select %p138, %s137, 31
      %s140 = smul.addr %s139, 8
      %s141 = scalar_lea.vmem %s1, %s140
      %p142 = pneg %p60
      %p143 = pneg %p57
      %p144 = pneg %p86
      %p145 = pneg %p83
      %s146 = smul.u32 8, %s13
      %p147 = scmp.lt.s32.totalorder %s146, 31
      %s148 = scalar_select %p147, %s146, 31
      %s149 = smul.addr %s148, 2
      %s150 = scalar_lea.vmem %s2, %s149
      %s151 = smul.u32 8, %s13
      %p152 = scmp.lt.s32.totalorder %s151, 31
      %s153 = scalar_select %p152, %s151, 31
      %s154 = smul.addr %s153, 2
      %s155 = scalar_lea.vmem %s0, %s154
      %s156 = smul.u32 8, %s13
      %s157 = smul.u32 8, %s13
      %p158 = scmp.lt.s32.totalorder %s157, 31
      %s159 = scalar_select %p158, %s157, 31
      %s160 = smul.addr %s159, 8
      %s161 = scalar_lea.vmem %s1, %s160
      %s162 = smul.u32 8, %s13
      %s163 = smul.u32 8, %s13
      %p164 = scmp.lt.s32.totalorder %s163, 31
      %s165 = scalar_select %p164, %s163, 31
      %s166 = smul.addr %s165, 2
      %s167 = scalar_lea.vmem %s2, %s166
      %s168 = smul.u32 8, %s13
      %v169 = vld [vmem:[%s155] sm:$0x3]
      %v170 = vld [vmem:[%s155 + $0x2] sm:$0x3]
      %v171 = vld [vmem:[%s155 + $0x4] sm:$0x3]
      %v172 = vld [vmem:[%s155 + $0x6] sm:$0x3]
      %v173 = vld [vmem:[%s155 + $0x8] sm:$0x3]
      %v174 = vld [vmem:[%s155 + $0xa] sm:$0x3]
      %v175 = vld [vmem:[%s155 + $0xc] sm:$0x3]
      %v176 = vld [vmem:[%s155 + $0xe] sm:$0x3]
      %v177 = vld [vmem:[%s161] sm:$0xff]
      %v178 = vld [vmem:[%s161 + $0x8] sm:$0xff]
      %v179 = vld [vmem:[%s161 + $0x10] sm:$0xff]
      %v180 = vld [vmem:[%s161 + $0x18] sm:$0xff]
      %v181 = vld [vmem:[%s161 + $0x20] sm:$0xff]
      %v182 = vld [vmem:[%s161 + $0x28] sm:$0xff]
      %v183 = vld [vmem:[%s161 + $0x30] sm:$0xff]
      %v184 = vld [vmem:[%s161 + $0x38] sm:$0xff]
      %vm185 = vcmask 64512
      %v187 = vsel %vm185, %v169, 0
      %189 = vmatprep.subr.mxu0 0.0
      %190 = vmatpush1.msra.mxu0 %v177
      %191 = vmatprep.subr.mxu0 0.0
      %192 = vmatpush1.msra.mxu0 0.0
      %193 = vmatprep.subr.mxu0 0.0
      %194 = vmatpush1.msra.mxu0 0.0
      %195 = vmatprep.subr.mxu0 0.0
      %196 = vmatpush1.msra.mxu0 0.0
      %197 = vmatprep.subr.mxu0 0.0
      %198 = vmatpush1.msra.mxu0 0.0
      %199 = vmatprep.subr.mxu0 0.0
      %200 = vmatpush1.msra.mxu0 0.0
      %201 = vmatprep.subr.mxu0 0.0
      %202 = vmatpush1.msra.mxu0 0.0
      %203 = vmatprep.subr.mxu0 0.0
      %204 = vmatpush1.msra.mxu0 0.0
      %205 = vmatprep.subr.mxu0 0.0
      %206 = vmatpush1.msra.mxu0 0.0
      %207 = vmatprep.subr.mxu0 0.0
      %208 = vmatpush1.msra.mxu0 0.0
      %209 = vmatprep.subr.mxu0 0.0
      %210 = vmatpush1.msra.mxu0 0.0
      %211 = vmatprep.subr.mxu0 0.0
      %212 = vmatpush1.msra.mxu0 0.0
      %213 = vmatprep.subr.mxu0 0.0
      %214 = vmatpush1.msra.mxu0 0.0
      %215 = vmatprep.subr.mxu0 0.0
      %216 = vmatpush1.msra.mxu0 0.0
      %217 = vmatprep.subr.mxu0 0.0
      %218 = vmatpush1.msra.mxu0 0.0
      %219 = vmatprep.subr.mxu0 0.0
      %220 = vmatpush1.msra.mxu0 0.0
      %221 = vmatprep.subr.mxu0 0.0
      %222 = vmatpush1.msra.mxu0 0.0
      %223 = vmatprep.subr.mxu0 0.0
      %224 = vmatpush1.msra.mxu0 0.0
      %225 = vmatprep.subr.mxu0 0.0
      %226 = vmatpush1.msra.mxu0 0.0
      %227 = vmatprep.subr.mxu0 0.0
      %228 = vmatpush1.msra.mxu0 0.0
      %229 = vmatprep.subr.mxu0 0.0
      %230 = vmatpush1.msra.mxu0 0.0
      %231 = vmatprep.subr.mxu0 0.0
      %232 = vmatpush1.msra.mxu0 0.0
      %233 = vmatprep.subr.mxu0 0.0
      %234 = vmatpush1.msra.mxu0 0.0
      %235 = vmatprep.subr.mxu0 0.0
      %236 = vmatpush1.msra.mxu0 0.0
      %237 = vmatprep.subr.mxu0 0.0
      %238 = vmatpush1.msra.mxu0 0.0
      %239 = vmatprep.subr.mxu0 0.0
      %240 = vmatpush1.msra.mxu0 0.0
      %241 = vmatprep.subr.mxu0 0.0
      %242 = vmatpush1.msra.mxu0 0.0
      %243 = vmatprep.subr.mxu0 0.0
      %244 = vmatpush1.msra.mxu0 0.0
      %245 = vmatprep.subr.mxu0 0.0
      %246 = vmatpush1.msra.mxu0 0.0
      %247 = vmatprep.subr.mxu0 0.0
      %248 = vmatpush1.msra.mxu0 0.0
      %249 = vmatprep.subr.mxu0 0.0
      %250 = vmatpush1.msra.mxu0 0.0
      %251 = vmatprep.subr.mxu0 0.0
      %252 = vmatpush1.msra.mxu0 0.0
      %253 = vmatprep.mubr.f32.mxu0 0.0
      %254 = vmatmul.mubr.f32.gmra.mrb[0].mxu0 %v187
      %v255 = vpop.f32.mrb[0].mxu0
      %v256 = vadd.f32 0.0, %v255
      %v257 = vpop.f32.mrb[0].mxu0
      %258 = vdwg.mxu0
      %v260 = vsel %vm185, %v170, 0
      %262 = vmatprep.subr.mxu0 0.0
      %263 = vmatpush1.msra.mxu0 %v178
      %264 = vmatprep.subr.mxu0 0.0
      %265 = vmatpush1.msra.mxu0 0.0
      %266 = vmatprep.subr.mxu0 0.0
      %267 = vmatpush1.msra.mxu0 0.0
      %268 = vmatprep.subr.mxu0 0.0
      %269 = vmatpush1.msra.mxu0 0.0
      %270 = vmatprep.subr.mxu0 0.0
      %271 = vmatpush1.msra.mxu0 0.0
      %272 = vmatprep.subr.mxu0 0.0
      %273 = vmatpush1.msra.mxu0 0.0
      %274 = vmatprep.subr.mxu0 0.0
      %275 = vmatpush1.msra.mxu0 0.0
      %276 = vmatprep.subr.mxu0 0.0
      %277 = vmatpush1.msra.mxu0 0.0
      %278 = vmatprep.subr.mxu0 0.0
      %279 = vmatpush1.msra.mxu0 0.0
      %280 = vmatprep.subr.mxu0 0.0
      %281 = vmatpush1.msra.mxu0 0.0
      %282 = vmatprep.subr.mxu0 0.0
      %283 = vmatpush1.msra.mxu0 0.0
      %284 = vmatprep.subr.mxu0 0.0
      %285 = vmatpush1.msra.mxu0 0.0
      %286 = vmatprep.subr.mxu0 0.0
      %287 = vmatpush1.msra.mxu0 0.0
      %288 = vmatprep.subr.mxu0 0.0
      %289 = vmatpush1.msra.mxu0 0.0
      %290 = vmatprep.subr.mxu0 0.0
      %291 = vmatpush1.msra.mxu0 0.0
      %292 = vmatprep.subr.mxu0 0.0
      %293 = vmatpush1.msra.mxu0 0.0
      %294 = vmatprep.subr.mxu0 0.0
      %295 = vmatpush1.msra.mxu0 0.0
      %296 = vmatprep.subr.mxu0 0.0
      %297 = vmatpush1.msra.mxu0 0.0
      %298 = vmatprep.subr.mxu0 0.0
      %299 = vmatpush1.msra.mxu0 0.0
      %300 = vmatprep.subr.mxu0 0.0
      %301 = vmatpush1.msra.mxu0 0.0
      %302 = vmatprep.subr.mxu0 0.0
      %303 = vmatpush1.msra.mxu0 0.0
      %304 = vmatprep.subr.mxu0 0.0
      %305 = vmatpush1.msra.mxu0 0.0
      %306 = vmatprep.subr.mxu0 0.0
      %307 = vmatpush1.msra.mxu0 0.0
      %308 = vmatprep.subr.mxu0 0.0
      %309 = vmatpush1.msra.mxu0 0.0
      %310 = vmatprep.subr.mxu0 0.0
      %311 = vmatpush1.msra.mxu0 0.0
      %312 = vmatprep.subr.mxu0 0.0
      %313 = vmatpush1.msra.mxu0 0.0
      %314 = vmatprep.subr.mxu0 0.0
      %315 = vmatpush1.msra.mxu0 0.0
      %316 = vmatprep.subr.mxu0 0.0
      %317 = vmatpush1.msra.mxu0 0.0
      %318 = vmatprep.subr.mxu0 0.0
      %319 = vmatpush1.msra.mxu0 0.0
      %320 = vmatprep.subr.mxu0 0.0
      %321 = vmatpush1.msra.mxu0 0.0
      %322 = vmatprep.subr.mxu0 0.0
      %323 = vmatpush1.msra.mxu0 0.0
      %324 = vmatprep.subr.mxu0 0.0
      %325 = vmatpush1.msra.mxu0 0.0
      %326 = vmatprep.mubr.f32.mxu0 0.0
      %327 = vmatmul.mubr.f32.gmra.mrb[0].mxu0 %v260
      %v328 = vpop.f32.mrb[0].mxu0
      %v329 = vadd.f32 0.0, %v328
      %v330 = vpop.f32.mrb[0].mxu0
      %331 = vdwg.mxu0
      %v333 = vsel %vm185, %v171, 0
      %335 = vmatprep.subr.mxu0 0.0
      %336 = vmatpush1.msra.mxu0 %v179
      %337 = vmatprep.subr.mxu0 0.0
      %338 = vmatpush1.msra.mxu0 0.0
      %339 = vmatprep.subr.mxu0 0.0
      %340 = vmatpush1.msra.mxu0 0.0
      %341 = vmatprep.subr.mxu0 0.0
      %342 = vmatpush1.msra.mxu0 0.0
      %343 = vmatprep.subr.mxu0 0.0
      %344 = vmatpush1.msra.mxu0 0.0
      %345 = vmatprep.subr.mxu0 0.0
      %346 = vmatpush1.msra.mxu0 0.0
      %347 = vmatprep.subr.mxu0 0.0
      %348 = vmatpush1.msra.mxu0 0.0
      %349 = vmatprep.subr.mxu0 0.0
      %350 = vmatpush1.msra.mxu0 0.0
      %351 = vmatprep.subr.mxu0 0.0
      %352 = vmatpush1.msra.mxu0 0.0
      %353 = vmatprep.subr.mxu0 0.0
      %354 = vmatpush1.msra.mxu0 0.0
      %355 = vmatprep.subr.mxu0 0.0
      %356 = vmatpush1.msra.mxu0 0.0
      %357 = vmatprep.subr.mxu0 0.0
      %358 = vmatpush1.msra.mxu0 0.0
      %359 = vmatprep.subr.mxu0 0.0
      %360 = vmatpush1.msra.mxu0 0.0
      %361 = vmatprep.subr.mxu0 0.0
      %362 = vmatpush1.msra.mxu0 0.0
      %363 = vmatprep.subr.mxu0 0.0
      %364 = vmatpush1.msra.mxu0 0.0
      %365 = vmatprep.subr.mxu0 0.0
      %366 = vmatpush1.msra.mxu0 0.0
      %367 = vmatprep.subr.mxu0 0.0
      %368 = vmatpush1.msra.mxu0 0.0
      %369 = vmatprep.subr.mxu0 0.0
      %370 = vmatpush1.msra.mxu0 0.0
      %371 = vmatprep.subr.mxu0 0.0
      %372 = vmatpush1.msra.mxu0 0.0
      %373 = vmatprep.subr.mxu0 0.0
      %374 = vmatpush1.msra.mxu0 0.0
      %375 = vmatprep.subr.mxu0 0.0
      %376 = vmatpush1.msra.mxu0 0.0
      %377 = vmatprep.subr.mxu0 0.0
      %378 = vmatpush1.msra.mxu0 0.0
      %379 = vmatprep.subr.mxu0 0.0
      %380 = vmatpush1.msra.mxu0 0.0
      %381 = vmatprep.subr.mxu0 0.0
      %382 = vmatpush1.msra.mxu0 0.0
      %383 = vmatprep.subr.mxu0 0.0
      %384 = vmatpush1.msra.mxu0 0.0
      %385 = vmatprep.subr.mxu0 0.0
      %386 = vmatpush1.msra.mxu0 0.0
      %387 = vmatprep.subr.mxu0 0.0
      %388 = vmatpush1.msra.mxu0 0.0
      %389 = vmatprep.subr.mxu0 0.0
      %390 = vmatpush1.msra.mxu0 0.0
      %391 = vmatprep.subr.mxu0 0.0
      %392 = vmatpush1.msra.mxu0 0.0
      %393 = vmatprep.subr.mxu0 0.0
      %394 = vmatpush1.msra.mxu0 0.0
      %395 = vmatprep.subr.mxu0 0.0
      %396 = vmatpush1.msra.mxu0 0.0
      %397 = vmatprep.subr.mxu0 0.0
      %398 = vmatpush1.msra.mxu0 0.0
      %399 = vmatprep.mubr.f32.mxu0 0.0
      %400 = vmatmul.mubr.f32.gmra.mrb[0].mxu0 %v333
      %v401 = vpop.f32.mrb[0].mxu0
      %v402 = vadd.f32 0.0, %v401
      %v403 = vpop.f32.mrb[0].mxu0
      %404 = vdwg.mxu0
      %v406 = vsel %vm185, %v172, 0
      %408 = vmatprep.subr.mxu0 0.0
      %409 = vmatpush1.msra.mxu0 %v180
      %410 = vmatprep.subr.mxu0 0.0
      %411 = vmatpush1.msra.mxu0 0.0
      %412 = vmatprep.subr.mxu0 0.0
      %413 = vmatpush1.msra.mxu0 0.0
      %414 = vmatprep.subr.mxu0 0.0
      %415 = vmatpush1.msra.mxu0 0.0
      %416 = vmatprep.subr.mxu0 0.0
      %417 = vmatpush1.msra.mxu0 0.0
      %418 = vmatprep.subr.mxu0 0.0
      %419 = vmatpush1.msra.mxu0 0.0
      %420 = vmatprep.subr.mxu0 0.0
      %421 = vmatpush1.msra.mxu0 0.0
      %422 = vmatprep.subr.mxu0 0.0
      %423 = vmatpush1.msra.mxu0 0.0
      %424 = vmatprep.subr.mxu0 0.0
      %425 = vmatpush1.msra.mxu0 0.0
      %426 = vmatprep.subr.mxu0 0.0
      %427 = vmatpush1.msra.mxu0 0.0
      %428 = vmatprep.subr.mxu0 0.0
      %429 = vmatpush1.msra.mxu0 0.0
      %430 = vmatprep.subr.mxu0 0.0
      %431 = vmatpush1.msra.mxu0 0.0
      %432 = vmatprep.subr.mxu0 0.0
      %433 = vmatpush1.msra.mxu0 0.0
      %434 = vmatprep.subr.mxu0 0.0
      %435 = vmatpush1.msra.mxu0 0.0
      %436 = vmatprep.subr.mxu0 0.0
      %437 = vmatpush1.msra.mxu0 0.0
      %438 = vmatprep.subr.mxu0 0.0
      %439 = vmatpush1.msra.mxu0 0.0
      %440 = vmatprep.subr.mxu0 0.0
      %441 = vmatpush1.msra.mxu0 0.0
      %442 = vmatprep.subr.mxu0 0.0
      %443 = vmatpush1.msra.mxu0 0.0
      %444 = vmatprep.subr.mxu0 0.0
      %445 = vmatpush1.msra.mxu0 0.0
      %446 = vmatprep.subr.mxu0 0.0
      %447 = vmatpush1.msra.mxu0 0.0
      %448 = vmatprep.subr.mxu0 0.0
      %449 = vmatpush1.msra.mxu0 0.0
      %450 = vmatprep.subr.mxu0 0.0
      %451 = vmatpush1.msra.mxu0 0.0
      %452 = vmatprep.subr.mxu0 0.0
      %453 = vmatpush1.msra.mxu0 0.0
      %454 = vmatprep.subr.mxu0 0.0
      %455 = vmatpush1.msra.mxu0 0.0
      %456 = vmatprep.subr.mxu0 0.0
      %457 = vmatpush1.msra.mxu0 0.0
      %458 = vmatprep.subr.mxu0 0.0
      %459 = vmatpush1.msra.mxu0 0.0
      %460 = vmatprep.subr.mxu0 0.0
      %461 = vmatpush1.msra.mxu0 0.0
      %462 = vmatprep.subr.mxu0 0.0
      %463 = vmatpush1.msra.mxu0 0.0
      %464 = vmatprep.subr.mxu0 0.0
      %465 = vmatpush1.msra.mxu0 0.0
      %466 = vmatprep.subr.mxu0 0.0
      %467 = vmatpush1.msra.mxu0 0.0
      %468 = vmatprep.subr.mxu0 0.0
      %469 = vmatpush1.msra.mxu0 0.0
      %470 = vmatprep.subr.mxu0 0.0
      %471 = vmatpush1.msra.mxu0 0.0
      %472 = vmatprep.mubr.f32.mxu0 0.0
      %473 = vmatmul.mubr.f32.gmra.mrb[0].mxu0 %v406
      %v474 = vpop.f32.mrb[0].mxu0
      %v475 = vadd.f32 0.0, %v474
      %v476 = vpop.f32.mrb[0].mxu0
      %477 = vdwg.mxu0
      %v479 = vsel %vm185, %v173, 0
      %481 = vmatprep.subr.mxu0 0.0
      %482 = vmatpush1.msra.mxu0 %v181
      %483 = vmatprep.subr.mxu0 0.0
      %484 = vmatpush1.msra.mxu0 0.0
      %485 = vmatprep.subr.mxu0 0.0
      %486 = vmatpush1.msra.mxu0 0.0
      %487 = vmatprep.subr.mxu0 0.0
      %488 = vmatpush1.msra.mxu0 0.0
      %489 = vmatprep.subr.mxu0 0.0
      %490 = vmatpush1.msra.mxu0 0.0
      %491 = vmatprep.subr.mxu0 0.0
      %492 = vmatpush1.msra.mxu0 0.0
      %493 = vmatprep.subr.mxu0 0.0
      %494 = vmatpush1.msra.mxu0 0.0
      %495 = vmatprep.subr.mxu0 0.0
      %496 = vmatpush1.msra.mxu0 0.0
      %497 = vmatprep.subr.mxu0 0.0
      %498 = vmatpush1.msra.mxu0 0.0
      %499 = vmatprep.subr.mxu0 0.0
      %500 = vmatpush1.msra.mxu0 0.0
      %501 = vmatprep.subr.mxu0 0.0
      %502 = vmatpush1.msra.mxu0 0.0
      %503 = vmatprep.subr.mxu0 0.0
      %504 = vmatpush1.msra.mxu0 0.0
      %505 = vmatprep.subr.mxu0 0.0
      %506 = vmatpush1.msra.mxu0 0.0
      %507 = vmatprep.subr.mxu0 0.0
      %508 = vmatpush1.msra.mxu0 0.0
      %509 = vmatprep.subr.mxu0 0.0
      %510 = vmatpush1.msra.mxu0 0.0
      %511 = vmatprep.subr.mxu0 0.0
      %512 = vmatpush1.msra.mxu0 0.0
      %513 = vmatprep.subr.mxu0 0.0
      %514 = vmatpush1.msra.mxu0 0.0
      %515 = vmatprep.subr.mxu0 0.0
      %516 = vmatpush1.msra.mxu0 0.0
      %517 = vmatprep.subr.mxu0 0.0
      %518 = vmatpush1.msra.mxu0 0.0
      %519 = vmatprep.subr.mxu0 0.0
      %520 = vmatpush1.msra.mxu0 0.0
      %521 = vmatprep.subr.mxu0 0.0
      %522 = vmatpush1.msra.mxu0 0.0
      %523 = vmatprep.subr.mxu0 0.0
      %524 = vmatpush1.msra.mxu0 0.0
      %525 = vmatprep.subr.mxu0 0.0
      %526 = vmatpush1.msra.mxu0 0.0
      %527 = vmatprep.subr.mxu0 0.0
      %528 = vmatpush1.msra.mxu0 0.0
      %529 = vmatprep.subr.mxu0 0.0
      %530 = vmatpush1.msra.mxu0 0.0
      %531 = vmatprep.subr.mxu0 0.0
      %532 = vmatpush1.msra.mxu0 0.0
      %533 = vmatprep.subr.mxu0 0.0
      %534 = vmatpush1.msra.mxu0 0.0
      %535 = vmatprep.subr.mxu0 0.0
      %536 = vmatpush1.msra.mxu0 0.0
      %537 = vmatprep.subr.mxu0 0.0
      %538 = vmatpush1.msra.mxu0 0.0
      %539 = vmatprep.subr.mxu0 0.0
      %540 = vmatpush1.msra.mxu0 0.0
      %541 = vmatprep.subr.mxu0 0.0
      %542 = vmatpush1.msra.mxu0 0.0
      %543 = vmatprep.subr.mxu0 0.0
      %544 = vmatpush1.msra.mxu0 0.0
      %545 = vmatprep.mubr.f32.mxu0 0.0
      %546 = vmatmul.mubr.f32.gmra.mrb[0].mxu0 %v479
      %v547 = vpop.f32.mrb[0].mxu0
      %v548 = vadd.f32 0.0, %v547
      %v549 = vpop.f32.mrb[0].mxu0
      %550 = vdwg.mxu0
      %v552 = vsel %vm185, %v174, 0
      %554 = vmatprep.subr.mxu0 0.0
      %555 = vmatpush1.msra.mxu0 %v182
      %556 = vmatprep.subr.mxu0 0.0
      %557 = vmatpush1.msra.mxu0 0.0
      %558 = vmatprep.subr.mxu0 0.0
      %559 = vmatpush1.msra.mxu0 0.0
      %560 = vmatprep.subr.mxu0 0.0
      %561 = vmatpush1.msra.mxu0 0.0
      %562 = vmatprep.subr.mxu0 0.0
      %563 = vmatpush1.msra.mxu0 0.0
      %564 = vmatprep.subr.mxu0 0.0
      %565 = vmatpush1.msra.mxu0 0.0
      %566 = vmatprep.subr.mxu0 0.0
      %567 = vmatpush1.msra.mxu0 0.0
      %568 = vmatprep.subr.mxu0 0.0
      %569 = vmatpush1.msra.mxu0 0.0
      %570 = vmatprep.subr.mxu0 0.0
      %571 = vmatpush1.msra.mxu0 0.0
      %572 = vmatprep.subr.mxu0 0.0
      %573 = vmatpush1.msra.mxu0 0.0
      %574 = vmatprep.subr.mxu0 0.0
      %575 = vmatpush1.msra.mxu0 0.0
      %576 = vmatprep.subr.mxu0 0.0
      %577 = vmatpush1.msra.mxu0 0.0
      %578 = vmatprep.subr.mxu0 0.0
      %579 = vmatpush1.msra.mxu0 0.0
      %580 = vmatprep.subr.mxu0 0.0
      %581 = vmatpush1.msra.mxu0 0.0
      %582 = vmatprep.subr.mxu0 0.0
      %583 = vmatpush1.msra.mxu0 0.0
      %584 = vmatprep.subr.mxu0 0.0
      %585 = vmatpush1.msra.mxu0 0.0
      %586 = vmatprep.subr.mxu0 0.0
      %587 = vmatpush1.msra.mxu0 0.0
      %588 = vmatprep.subr.mxu0 0.0
      %589 = vmatpush1.msra.mxu0 0.0
      %590 = vmatprep.subr.mxu0 0.0
      %591 = vmatpush1.msra.mxu0 0.0
      %592 = vmatprep.subr.mxu0 0.0
      %593 = vmatpush1.msra.mxu0 0.0
      %594 = vmatprep.subr.mxu0 0.0
      %595 = vmatpush1.msra.mxu0 0.0
      %596 = vmatprep.subr.mxu0 0.0
      %597 = vmatpush1.msra.mxu0 0.0
      %598 = vmatprep.subr.mxu0 0.0
      %599 = vmatpush1.msra.mxu0 0.0
      %600 = vmatprep.subr.mxu0 0.0
      %601 = vmatpush1.msra.mxu0 0.0
      %602 = vmatprep.subr.mxu0 0.0
      %603 = vmatpush1.msra.mxu0 0.0
      %604 = vmatprep.subr.mxu0 0.0
      %605 = vmatpush1.msra.mxu0 0.0
      %606 = vmatprep.subr.mxu0 0.0
      %607 = vmatpush1.msra.mxu0 0.0
      %608 = vmatprep.subr.mxu0 0.0
      %609 = vmatpush1.msra.mxu0 0.0
      %610 = vmatprep.subr.mxu0 0.0
      %611 = vmatpush1.msra.mxu0 0.0
      %612 = vmatprep.subr.mxu0 0.0
      %613 = vmatpush1.msra.mxu0 0.0
      %614 = vmatprep.subr.mxu0 0.0
      %615 = vmatpush1.msra.mxu0 0.0
      %616 = vmatprep.subr.mxu0 0.0
      %617 = vmatpush1.msra.mxu0 0.0
      %618 = vmatprep.mubr.f32.mxu0 0.0
      %619 = vmatmul.mubr.f32.gmra.mrb[0].mxu0 %v552
      %v620 = vpop.f32.mrb[0].mxu0
      %v621 = vadd.f32 0.0, %v620
      %v622 = vpop.f32.mrb[0].mxu0
      %623 = vdwg.mxu0
      %v625 = vsel %vm185, %v175, 0
      %627 = vmatprep.subr.mxu0 0.0
      %628 = vmatpush1.msra.mxu0 %v183
      %629 = vmatprep.subr.mxu0 0.0
      %630 = vmatpush1.msra.mxu0 0.0
      %631 = vmatprep.subr.mxu0 0.0
      %632 = vmatpush1.msra.mxu0 0.0
      %633 = vmatprep.subr.mxu0 0.0
      %634 = vmatpush1.msra.mxu0 0.0
      %635 = vmatprep.subr.mxu0 0.0
      %636 = vmatpush1.msra.mxu0 0.0
      %637 = vmatprep.subr.mxu0 0.0
      %638 = vmatpush1.msra.mxu0 0.0
      %639 = vmatprep.subr.mxu0 0.0
      %640 = vmatpush1.msra.mxu0 0.0
      %641 = vmatprep.subr.mxu0 0.0
      %642 = vmatpush1.msra.mxu0 0.0
      %643 = vmatprep.subr.mxu0 0.0
      %644 = vmatpush1.msra.mxu0 0.0
      %645 = vmatprep.subr.mxu0 0.0
      %646 = vmatpush1.msra.mxu0 0.0
      %647 = vmatprep.subr.mxu0 0.0
      %648 = vmatpush1.msra.mxu0 0.0
      %649 = vmatprep.subr.mxu0 0.0
      %650 = vmatpush1.msra.mxu0 0.0
      %651 = vmatprep.subr.mxu0 0.0
      %652 = vmatpush1.msra.mxu0 0.0
      %653 = vmatprep.subr.mxu0 0.0
      %654 = vmatpush1.msra.mxu0 0.0
      %655 = vmatprep.subr.mxu0 0.0
      %656 = vmatpush1.msra.mxu0 0.0
      %657 = vmatprep.subr.mxu0 0.0
      %658 = vmatpush1.msra.mxu0 0.0
      %659 = vmatprep.subr.mxu0 0.0
      %660 = vmatpush1.msra.mxu0 0.0
      %661 = vmatprep.subr.mxu0 0.0
      %662 = vmatpush1.msra.mxu0 0.0
      %663 = vmatprep.subr.mxu0 0.0
      %664 = vmatpush1.msra.mxu0 0.0
      %665 = vmatprep.subr.mxu0 0.0
      %666 = vmatpush1.msra.mxu0 0.0
      %667 = vmatprep.subr.mxu0 0.0
      %668 = vmatpush1.msra.mxu0 0.0
      %669 = vmatprep.subr.mxu0 0.0
      %670 = vmatpush1.msra.mxu0 0.0
      %671 = vmatprep.subr.mxu0 0.0
      %672 = vmatpush1.msra.mxu0 0.0
      %673 = vmatprep.subr.mxu0 0.0
      %674 = vmatpush1.msra.mxu0 0.0
      %675 = vmatprep.subr.mxu0 0.0
      %676 = vmatpush1.msra.mxu0 0.0
      %677 = vmatprep.subr.mxu0 0.0
      %678 = vmatpush1.msra.mxu0 0.0
      %679 = vmatprep.subr.mxu0 0.0
      %680 = vmatpush1.msra.mxu0 0.0
      %681 = vmatprep.subr.mxu0 0.0
      %682 = vmatpush1.msra.mxu0 0.0
      %683 = vmatprep.subr.mxu0 0.0
      %684 = vmatpush1.msra.mxu0 0.0
      %685 = vmatprep.subr.mxu0 0.0
      %686 = vmatpush1.msra.mxu0 0.0
      %687 = vmatprep.subr.mxu0 0.0
      %688 = vmatpush1.msra.mxu0 0.0
      %689 = vmatprep.subr.mxu0 0.0
      %690 = vmatpush1.msra.mxu0 0.0
      %691 = vmatprep.mubr.f32.mxu0 0.0
      %692 = vmatmul.mubr.f32.gmra.mrb[0].mxu0 %v625
      %v693 = vpop.f32.mrb[0].mxu0
      %v694 = vadd.f32 0.0, %v693
      %v695 = vpop.f32.mrb[0].mxu0
      %696 = vdwg.mxu0
      %v698 = vsel %vm185, %v176, 0
      %700 = vmatprep.subr.mxu0 0.0
      %701 = vmatpush1.msra.mxu0 %v184
      %702 = vmatprep.subr.mxu0 0.0
      %703 = vmatpush1.msra.mxu0 0.0
      %704 = vmatprep.subr.mxu0 0.0
      %705 = vmatpush1.msra.mxu0 0.0
      %706 = vmatprep.subr.mxu0 0.0
      %707 = vmatpush1.msra.mxu0 0.0
      %708 = vmatprep.subr.mxu0 0.0
      %709 = vmatpush1.msra.mxu0 0.0
      %710 = vmatprep.subr.mxu0 0.0
      %711 = vmatpush1.msra.mxu0 0.0
      %712 = vmatprep.subr.mxu0 0.0
      %713 = vmatpush1.msra.mxu0 0.0
      %714 = vmatprep.subr.mxu0 0.0
      %715 = vmatpush1.msra.mxu0 0.0
      %716 = vmatprep.subr.mxu0 0.0
      %717 = vmatpush1.msra.mxu0 0.0
      %718 = vmatprep.subr.mxu0 0.0
      %719 = vmatpush1.msra.mxu0 0.0
      %720 = vmatprep.subr.mxu0 0.0
      %721 = vmatpush1.msra.mxu0 0.0
      %722 = vmatprep.subr.mxu0 0.0
      %723 = vmatpush1.msra.mxu0 0.0
      %724 = vmatprep.subr.mxu0 0.0
      %725 = vmatpush1.msra.mxu0 0.0
      %726 = vmatprep.subr.mxu0 0.0
      %727 = vmatpush1.msra.mxu0 0.0
      %728 = vmatprep.subr.mxu0 0.0
      %729 = vmatpush1.msra.mxu0 0.0
      %730 = vmatprep.subr.mxu0 0.0
      %731 = vmatpush1.msra.mxu0 0.0
      %732 = vmatprep.subr.mxu0 0.0
      %733 = vmatpush1.msra.mxu0 0.0
      %734 = vmatprep.subr.mxu0 0.0
      %735 = vmatpush1.msra.mxu0 0.0
      %736 = vmatprep.subr.mxu0 0.0
      %737 = vmatpush1.msra.mxu0 0.0
      %738 = vmatprep.subr.mxu0 0.0
      %739 = vmatpush1.msra.mxu0 0.0
      %740 = vmatprep.subr.mxu0 0.0
      %741 = vmatpush1.msra.mxu0 0.0
      %742 = vmatprep.subr.mxu0 0.0
      %743 = vmatpush1.msra.mxu0 0.0
      %744 = vmatprep.subr.mxu0 0.0
      %745 = vmatpush1.msra.mxu0 0.0
      %746 = vmatprep.subr.mxu0 0.0
      %747 = vmatpush1.msra.mxu0 0.0
      %748 = vmatprep.subr.mxu0 0.0
      %749 = vmatpush1.msra.mxu0 0.0
      %750 = vmatprep.subr.mxu0 0.0
      %751 = vmatpush1.msra.mxu0 0.0
      %752 = vmatprep.subr.mxu0 0.0
      %753 = vmatpush1.msra.mxu0 0.0
      %754 = vmatprep.subr.mxu0 0.0
      %755 = vmatpush1.msra.mxu0 0.0
      %756 = vmatprep.subr.mxu0 0.0
      %757 = vmatpush1.msra.mxu0 0.0
      %758 = vmatprep.subr.mxu0 0.0
      %759 = vmatpush1.msra.mxu0 0.0
      %760 = vmatprep.subr.mxu0 0.0
      %761 = vmatpush1.msra.mxu0 0.0
      %762 = vmatprep.subr.mxu0 0.0
      %763 = vmatpush1.msra.mxu0 0.0
      %764 = vmatprep.mubr.f32.mxu0 0.0
      %765 = vmatmul.mubr.f32.gmra.mrb[0].mxu0 %v698
      %v766 = vpop.f32.mrb[0].mxu0
      %v767 = vadd.f32 0.0, %v766
      %v768 = vpop.f32.mrb[0].mxu0
      %769 = vdwg.mxu0
      %vm770 = vcmask 58368
      %771 = vst.msk [vmem:[%s167] sm:$0x3] %vm770, %v256
      %772 = vst.msk [vmem:[%s167 + $0x2] sm:$0x3] %vm770, %v329
      %773 = vst.msk [vmem:[%s167 + $0x4] sm:$0x3] %vm770, %v402
      %774 = vst.msk [vmem:[%s167 + $0x6] sm:$0x3] %vm770, %v475
      %775 = vst.msk [vmem:[%s167 + $0x8] sm:$0x3] %vm770, %v548
      %776 = vst.msk [vmem:[%s167 + $0xa] sm:$0x3] %vm770, %v621
      %777 = vst.msk [vmem:[%s167 + $0xc] sm:$0x3] %vm770, %v694
      %778 = vst.msk [vmem:[%s167 + $0xe] sm:$0x3] %vm770, %v767
      %s779 = smul.u32 8, %s13
      %p780 = scmp.lt.s32.totalorder %s779, 31
      %s781 = scalar_select %p780, %s779, 31
      %s782 = smul.addr %s781, 2
      %s783 = scalar_lea.vmem %s2, %s782
      // Predicated region
      $region29: #{tpu_custom_call.1} parent=27 // pred_check
        %p784 = pneg %p83
      $region30: #{tpu_custom_call.1} parent=27 // pred_check_branch
        %786 = sbr.rel (%p784) target = $region32
      $region31: #{tpu_custom_call.1} parent=27 // pred_region
        %s787 = smul.u32 8, %s13
      $region32: #{tpu_custom_call.1} parent=27 // pred_fallthru
        _
    $region28: #{tpu_custom_call.1} parent=5 // pred_fallthru
      _
    %p788 = scmp.le.s32.totalorder 2, %s8
    // Predicated region
    $region33: #{tpu_custom_call.1} parent=5 // pred_check
      %p789 = pneg %p788
    $region34: #{tpu_custom_call.1} parent=5 // pred_check_branch
      %791 = sbr.rel (%p789) target = $region36
    $region35: #{tpu_custom_call.1} parent=5 // pred_region
      %s792 = ssub.s32 %s8, 2
      // Predicated region
      $region37: #{tpu_custom_call.1} parent=35 // pred_check
        %p793 = pneg %p89
      $region38: #{tpu_custom_call.1} parent=35 // pred_check_branch
        %795 = sbr.rel (%p793) target = $region40
      $region39: #{tpu_custom_call.1} parent=35 // pred_region
        %s796 = smul.u32 8, %s14
        %p797 = scmp.lt.s32.totalorder %s796, 31
        %s798 = scalar_select %p797, %s796, 31
        %s799 = smul.addr %s798, 2
        %s800 = scalar_lea.vmem %s2, %s799
      $region40: #{tpu_custom_call.1} parent=35 // pred_fallthru
        _
    $region36: #{tpu_custom_call.1} parent=5 // pred_fallthru
      _
  $region6: #{tpu_custom_call.1} parent=0 // loop_footer
    %s12 = sadd.s32 1, %s8
  $region7: #{tpu_custom_call.1} parent=0 // loop_footer_branch
    %7 = sbr.rel target = $region3
  $region8: #{tpu_custom_call.1} parent=0 // loop_exit
    _

</llo_original>
